<compile_context>
chip_gen: v7x
topology: tpu7x:2x2x1
jax: 0.10.0
libtpu: 0.0.40
codegen_flags: <defaults>
</compile_context>

<pallas_src>
import jax
import jax.numpy as jnp
from jax.experimental import pallas as pl
from jax.experimental.pallas import tpu as pltpu

LANE = 128              # lane width: pad hidden/output feature dims to this
SUBLANE = 8             # sublane width: batch tile must be a multiple of this
MAX_BLOCK_BATCH = 4096  # safe on every generation without vmem_limit_bytes


def _round_up(x, m):
    return (x + m - 1) // m * m


def _cdiv(a, b):
    return -(-a // b)


def _qnetwork_kernel(x_ref, w1_ref, b1_ref, w2_ref, b2_ref, w3_ref, b3_ref,
                     out_ref):
    # Cast the raw f32 state tile to bf16 in-VMEM (input streamed un-padded).
    x = x_ref[...].astype(jnp.bfloat16)
    # Layer 1: relu(x @ W1 + b1)   (bf16 operands, f32 MXU accumulation)
    h1 = jnp.dot(x, w1_ref[...], preferred_element_type=jnp.float32)
    h1 = jnp.maximum(h1 + b1_ref[...], 0.0).astype(jnp.bfloat16)
    # Layer 2: relu(h1 @ W2 + b2)
    h2 = jnp.dot(h1, w2_ref[...], preferred_element_type=jnp.float32)
    h2 = jnp.maximum(h2 + b2_ref[...], 0.0).astype(jnp.bfloat16)
    # Output head: h2 @ W3 + b3 (no activation); f32, lane-dense store
    q = jnp.dot(h2, w3_ref[...], preferred_element_type=jnp.float32)
    out_ref[...] = (q + b3_ref[...]).astype(out_ref.dtype)


def init_qnetwork_params(key, state_size, action_size, fc1_size=64,
                         fc2_size=64):
    """Deterministic synthetic params. Weight layout: (in, out), f32."""
    ks = jax.random.split(key, 6)

    def lin(kw, kb, fan_in, fan_out):
        bound = 1.0 / jnp.sqrt(fan_in)  # PyTorch nn.Linear default init range
        w = jax.random.uniform(kw, (fan_in, fan_out), jnp.float32,
                               -bound, bound)
        b = jax.random.uniform(kb, (1, fan_out), jnp.float32, -bound, bound)
        return w, b

    w1, b1 = lin(ks[0], ks[1], state_size, fc1_size)
    w2, b2 = lin(ks[2], ks[3], fc1_size, fc2_size)
    w3, b3 = lin(ks[4], ks[5], fc2_size, action_size)
    return {"w1": w1, "b1": b1, "w2": w2, "b2": b2, "w3": w3, "b3": b3}


def prepare_qnetwork_params(params):
    """Weights -> bf16, biases -> f32; pad feature dims to 128 lanes.

    W1 keeps its un-padded input dim (state_size) so the raw state can be
    streamed without any wrapper-side padding.  All padded weight rows/cols
    and bias entries are exactly zero, so the padded network is bit-identical
    to the original on the first `action_size` outputs.
    """
    def pad_w(w, pad_in=True):
        fi, fo = w.shape
        fi_p = _round_up(fi, LANE) if pad_in else fi
        wp = jnp.zeros((fi_p, _round_up(fo, LANE)), jnp.bfloat16)
        return wp.at[:fi, :fo].set(w.astype(jnp.bfloat16))

    def pad_b(b):
        fo = b.shape[-1]
        bp = jnp.zeros((1, _round_up(fo, LANE)), jnp.float32)
        return bp.at[:, :fo].set(b.reshape(1, fo).astype(jnp.float32))

    return {
        "w1": pad_w(params["w1"], pad_in=False), "b1": pad_b(params["b1"]),
        "w2": pad_w(params["w2"]), "b2": pad_b(params["b2"]),
        "w3": pad_w(params["w3"]), "b3": pad_b(params["b3"]),
    }


def qnetwork_forward(state, padded_params, action_size, block_batch=1024):
    """Fused 3-layer MLP forward. state: (B, state_size) f32 -> (B, A) f32."""
    w1, b1, w2, b2, w3, b3 = (padded_params[k] for k in
                              ("w1", "b1", "w2", "b2", "w3", "b3"))
    batch, state_size = state.shape
    assert w1.shape[0] == state_size, "W1 input dim must match state_size"
    d_out = w3.shape[1]

    # --- batch tiling -------------------------------------------------------
    # Derive the number of grid steps first, then size the tile from it, so
    # batch sizes just past a tile boundary don't nearly double padded work.
    block_batch = min(block_batch, MAX_BLOCK_BATCH)
    batch8 = _round_up(batch, SUBLANE)
    n_steps = _cdiv(batch8, block_batch)
    # Keep >=2 parallel grid steps for v7x's two TensorCores on real batches.
    if n_steps == 1 and batch8 >= 256:
        n_steps = 2
    tb = _round_up(_cdiv(batch8, n_steps), SUBLANE)
    batch_pad = tb * n_steps

    # Pad only the batch dim (rows) of the raw f32 state; no feature padding.
    if batch_pad != batch:
        state = jnp.pad(state, ((0, batch_pad - batch), (0, 0)))

    # Constant index map => weights/biases stay VMEM-resident across steps.
    resident = lambda a: pl.BlockSpec(a.shape, lambda i: (0,) * a.ndim)

    flops = 2 * batch_pad * (state_size * w1.shape[1]
                             + w2.shape[0] * w2.shape[1]
                             + w3.shape[0] * w3.shape[1])
    bytes_accessed = (state.size * state.dtype.itemsize           # input
                      + batch_pad * d_out * 4                     # output
                      + sum(int(a.size) * a.dtype.itemsize
                            for a in (w1, b1, w2, b2, w3, b3)))   # params

    q_pad = pl.pallas_call(
        _qnetwork_kernel,
        out_shape=jax.ShapeDtypeStruct((batch_pad, d_out), jnp.float32),
        grid=(n_steps,),
        in_specs=[
            # streamed state tile: last dim == full array dim (legal, un-padded)
            pl.BlockSpec((tb, state_size), lambda i: (i, 0)),
            resident(w1), resident(b1),
            resident(w2), resident(b2),
            resident(w3), resident(b3),
        ],
        out_specs=pl.BlockSpec((tb, d_out), lambda i: (i, 0)),
        compiler_params=pltpu.CompilerParams(
            dimension_semantics=("parallel",)),   # megacore sharding on v7x
        cost_estimate=pl.CostEstimate(flops=flops, transcendentals=0,
                                      bytes_accessed=bytes_accessed),
    )(state, w1, b1, w2, b2, w3, b3)

    return q_pad[:batch, :action_size]


if __name__ == "__main__":
    key = jax.random.PRNGKey(0)
    k_param, k_x = jax.random.split(key)

    # LunarLander-ish sizes: state_size=8, action_size=4, hidden 64/64.
    batch, state_size, action_size = 2, 8, 4
    raw_params = init_qnetwork_params(k_param, state_size, action_size)
    padded_params = prepare_qnetwork_params(raw_params)
    state = jax.random.normal(k_x, (batch, state_size), jnp.float32)

    q_values = qnetwork_forward(state, padded_params, action_size)
    jax.block_until_ready(q_values)

    # Reference in plain JAX, replicating the kernel's bf16-operand /
    # f32-accumulation dtype flow (padding itself is exact).
    xb = state.astype(jnp.bfloat16)
    h1 = jnp.maximum(
        jnp.dot(xb, raw_params["w1"].astype(jnp.bfloat16),
                preferred_element_type=jnp.float32) + raw_params["b1"], 0.0)
    h1 = h1.astype(jnp.bfloat16)
    h2 = jnp.maximum(
        jnp.dot(h1, raw_params["w2"].astype(jnp.bfloat16),
                preferred_element_type=jnp.float32) + raw_params["b2"], 0.0)
    h2 = h2.astype(jnp.bfloat16)
    ref = jnp.dot(h2, raw_params["w3"].astype(jnp.bfloat16),
                  preferred_element_type=jnp.float32) + raw_params["b3"]

    assert q_values.shape == (batch, action_size)
    assert jnp.allclose(q_values, ref, atol=1e-2, rtol=1e-2), (q_values, ref)

    print("KERNEL_OK")
</pallas_src>

<mosaic_0001>
module attributes {stable_mosaic.version = 11 : i64} {
  func.func @_qnetwork_kernel(%arg0: i32, %arg1: memref<8x8xf32, #tpu.memory_space<vmem>>, %arg2: memref<8x128xbf16, #tpu.memory_space<vmem>>, %arg3: memref<1x128xf32, #tpu.memory_space<vmem>>, %arg4: memref<128x128xbf16, #tpu.memory_space<vmem>>, %arg5: memref<1x128xf32, #tpu.memory_space<vmem>>, %arg6: memref<128x128xbf16, #tpu.memory_space<vmem>>, %arg7: memref<1x128xf32, #tpu.memory_space<vmem>>, %arg8: memref<8x128xf32, #tpu.memory_space<vmem>>) attributes {dimension_semantics = [#tpu.dimension_semantics<parallel>], iteration_bounds = array<i64: 1>, scalar_prefetch = 0 : i64, scratch_operands = 0 : i64, tpu.core_type = #tpu.core_type<tc>, window_params = [{transform_indices = @transform_0, window_bounds = array<i64: 8, 8>}, {pipeline_mode = #tpu.pipeline_mode<synchronous>, transform_indices = @transform_1, window_bounds = array<i64: 8, 128>}, {pipeline_mode = #tpu.pipeline_mode<synchronous>, transform_indices = @transform_2, window_bounds = array<i64: 1, 128>}, {pipeline_mode = #tpu.pipeline_mode<synchronous>, transform_indices = @transform_3, window_bounds = array<i64: 128, 128>}, {pipeline_mode = #tpu.pipeline_mode<synchronous>, transform_indices = @transform_4, window_bounds = array<i64: 1, 128>}, {pipeline_mode = #tpu.pipeline_mode<synchronous>, transform_indices = @transform_5, window_bounds = array<i64: 128, 128>}, {pipeline_mode = #tpu.pipeline_mode<synchronous>, transform_indices = @transform_6, window_bounds = array<i64: 1, 128>}, {transform_indices = @transform_7, window_bounds = array<i64: 8, 128>}]} {
    %c0 = arith.constant 0 : index
    %c0_0 = arith.constant 0 : index
    %0 = vector.load %arg1[%c0, %c0_0] : memref<8x8xf32, #tpu.memory_space<vmem>>, vector<8x8xf32>
    %1 = arith.truncf %0 : vector<8x8xf32> to vector<8x8xbf16>
    %c0_1 = arith.constant 0 : index
    %c0_2 = arith.constant 0 : index
    %2 = vector.load %arg2[%c0_1, %c0_2] : memref<8x128xbf16, #tpu.memory_space<vmem>>, vector<8x128xbf16>
    %cst = arith.constant dense<0.000000e+00> : vector<8x128xf32>
    %3 = tpu.matmul %1, %2, %cst {dimension_numbers = #tpu.dot_dimension_numbers<[1], [0], [0], [1], [0, 0, 1, 1], [], []>} : vector<8x8xbf16>, vector<8x128xbf16>, vector<8x128xf32> -> vector<8x128xf32>
    %c0_3 = arith.constant 0 : index
    %c0_4 = arith.constant 0 : index
    %4 = vector.load %arg3[%c0_3, %c0_4] : memref<1x128xf32, #tpu.memory_space<vmem>>, vector<1x128xf32>
    %5 = vector.broadcast %4 : vector<1x128xf32> to vector<8x128xf32>
    %6 = arith.addf %3, %5 : vector<8x128xf32>
    %cst_5 = arith.constant 0.000000e+00 : f32
    %7 = vector.broadcast %cst_5 : f32 to vector<8x128xf32>
    %8 = arith.maximumf %6, %7 : vector<8x128xf32>
    %9 = arith.truncf %8 : vector<8x128xf32> to vector<8x128xbf16>
    %c0_6 = arith.constant 0 : index
    %c0_7 = arith.constant 0 : index
    %10 = vector.load %arg4[%c0_6, %c0_7] : memref<128x128xbf16, #tpu.memory_space<vmem>>, vector<128x128xbf16>
    %cst_8 = arith.constant dense<0.000000e+00> : vector<8x128xf32>
    %11 = tpu.matmul %9, %10, %cst_8 {dimension_numbers = #tpu.dot_dimension_numbers<[1], [0], [0], [1], [0, 0, 1, 1], [], []>} : vector<8x128xbf16>, vector<128x128xbf16>, vector<8x128xf32> -> vector<8x128xf32>
    %c0_9 = arith.constant 0 : index
    %c0_10 = arith.constant 0 : index
    %12 = vector.load %arg5[%c0_9, %c0_10] : memref<1x128xf32, #tpu.memory_space<vmem>>, vector<1x128xf32>
    %13 = vector.broadcast %12 : vector<1x128xf32> to vector<8x128xf32>
    %14 = arith.addf %11, %13 : vector<8x128xf32>
    %cst_11 = arith.constant 0.000000e+00 : f32
    %15 = vector.broadcast %cst_11 : f32 to vector<8x128xf32>
    %16 = arith.maximumf %14, %15 : vector<8x128xf32>
    %17 = arith.truncf %16 : vector<8x128xf32> to vector<8x128xbf16>
    %c0_12 = arith.constant 0 : index
    %c0_13 = arith.constant 0 : index
    %18 = vector.load %arg6[%c0_12, %c0_13] : memref<128x128xbf16, #tpu.memory_space<vmem>>, vector<128x128xbf16>
    %cst_14 = arith.constant dense<0.000000e+00> : vector<8x128xf32>
    %19 = tpu.matmul %17, %18, %cst_14 {dimension_numbers = #tpu.dot_dimension_numbers<[1], [0], [0], [1], [0, 0, 1, 1], [], []>} : vector<8x128xbf16>, vector<128x128xbf16>, vector<8x128xf32> -> vector<8x128xf32>
    %c0_15 = arith.constant 0 : index
    %c0_16 = arith.constant 0 : index
    %20 = vector.load %arg7[%c0_15, %c0_16] : memref<1x128xf32, #tpu.memory_space<vmem>>, vector<1x128xf32>
    %21 = vector.broadcast %20 : vector<1x128xf32> to vector<8x128xf32>
    %22 = arith.addf %19, %21 : vector<8x128xf32>
    %c0_17 = arith.constant 0 : index
    %c0_18 = arith.constant 0 : index
    %23 = vector.load %arg8[%c0_17, %c0_18] : memref<8x128xf32, #tpu.memory_space<vmem>>, vector<8x128xf32>
    tpu.vector_store %arg8[%c0_17, %c0_18], %22 {strides = array<i32>} : memref<8x128xf32, #tpu.memory_space<vmem>>, vector<8x128xf32>,
    return
  }
  func.func @transform_0(%arg0: i32) -> (i32, i32) {
    %c0_i32 = arith.constant 0 : i32
    %c0_i32_0 = arith.constant 0 : i32
    return %arg0, %c0_i32 : i32, i32
  }
  func.func @transform_1(%arg0: i32) -> (i32, i32) {
    %c0_i32 = arith.constant 0 : i32
    %c0_i32_0 = arith.constant 0 : i32
    %c0_i32_1 = arith.constant 0 : i32
    return %c0_i32, %c0_i32_0 : i32, i32
  }
  func.func @transform_2(%arg0: i32) -> (i32, i32) {
    %c0_i32 = arith.constant 0 : i32
    %c0_i32_0 = arith.constant 0 : i32
    %c0_i32_1 = arith.constant 0 : i32
    return %c0_i32, %c0_i32_0 : i32, i32
  }
  func.func @transform_3(%arg0: i32) -> (i32, i32) {
    %c0_i32 = arith.constant 0 : i32
    %c0_i32_0 = arith.constant 0 : i32
    %c0_i32_1 = arith.constant 0 : i32
    return %c0_i32, %c0_i32_0 : i32, i32
  }
  func.func @transform_4(%arg0: i32) -> (i32, i32) {
    %c0_i32 = arith.constant 0 : i32
    %c0_i32_0 = arith.constant 0 : i32
    %c0_i32_1 = arith.constant 0 : i32
    return %c0_i32, %c0_i32_0 : i32, i32
  }
  func.func @transform_5(%arg0: i32) -> (i32, i32) {
    %c0_i32 = arith.constant 0 : i32
    %c0_i32_0 = arith.constant 0 : i32
    %c0_i32_1 = arith.constant 0 : i32
    return %c0_i32, %c0_i32_0 : i32, i32
  }
  func.func @transform_6(%arg0: i32) -> (i32, i32) {
    %c0_i32 = arith.constant 0 : i32
    %c0_i32_0 = arith.constant 0 : i32
    %c0_i32_1 = arith.constant 0 : i32
    return %c0_i32, %c0_i32_0 : i32, i32
  }
  func.func @transform_7(%arg0: i32) -> (i32, i32) {
    %c0_i32 = arith.constant 0 : i32
    %c0_i32_0 = arith.constant 0 : i32
    return %arg0, %c0_i32 : i32, i32
  }
}

</mosaic_0001>

<llo_original>
// kernel: tpu_custom_call.1
$region0: #{tpu_custom_call.1}
  #allocation0 [shape = 'u32[]', space=smem, size = 0x4, offset = 0x4, fixed_abs, tag = 'smem constant byte address 0x4 - core index']
  #allocation1 [shape = 'u32[144,128]{1,0:T(1,128)}', space=vmem, size = 0x12000, scoped, tag = 'internal scratch']
  %s0 = inlined_call_operand.hbm [shape: f32[8,8], index: 0, kind: input, shape index: {}]
  %s1 = inlined_call_operand.hbm [shape: bf16[8,128], index: 1, kind: input, shape index: {}]
  %s2 = inlined_call_operand.vmem [shape: f32[1,128], index: 2, kind: input, shape index: {}]
  %s3 = inlined_call_operand.hbm [shape: bf16[128,128], index: 3, kind: input, shape index: {}]
  %s4 = inlined_call_operand.vmem [shape: f32[1,128], index: 4, kind: input, shape index: {}]
  %s5 = inlined_call_operand.hbm [shape: bf16[128,128], index: 5, kind: input, shape index: {}]
  %s6 = inlined_call_operand.vmem [shape: f32[1,128], index: 6, kind: input, shape index: {}]
  %s7 = inlined_call_operand.hbm [shape: f32[8,128], index: 7, kind: output, shape index: {}]
  %s8 = sld [smem:[#allocation0]]
  $region54: #{tpu_custom_call.1} parent=0
    _
  %s10 = ssub.s32 1, %s8
  %s11 = scalar_select 0, %s10, %s8
  $region1: #{tpu_custom_call.1} parent=0
    #allocation2 [shape = 'u8[4096]{0}', space=vmem, size = 0x1000, scoped, tag = 'input window, operand 0, single buffered']
    #allocation3 [shape = 's32[1]{0}', space=sflag, size = 0x4, scoped, tag = 'scoped memory for tpu_custom_call.1']
    #allocation4 [shape = 's32[1]{0}', space=sflag, size = 0x4, scoped, tag = 'scoped memory for tpu_custom_call.1']
    #allocation5 [shape = 'u8[2048]{0}', space=vmem, size = 0x800, scoped, tag = 'input window, operand 1, single buffered']
    #allocation6 [shape = 's32[1]{0}', space=sflag, size = 0x4, scoped, tag = 'scoped memory for tpu_custom_call.1']
    #allocation7 [shape = 'u8[32768]{0}', space=vmem, size = 0x8000, scoped, tag = 'input window, operand 3, single buffered']
    #allocation8 [shape = 'u8[32768]{0}', space=vmem, size = 0x8000, scoped, tag = 'input window, operand 5, single buffered']
    #allocation9 [shape = 's32[1]{0}', space=sflag, size = 0x4, scoped, tag = 'scoped memory for tpu_custom_call.1']
    #allocation10 [shape = 'u8[4096]{0}', space=vmem, size = 0x1000, scoped, tag = 'output window, operand 0, single buffered']
    %12 = vsyncpa [#allocation3], 0
    %13 = vsyncpa [#allocation6], 0
    %14 = vsyncpa [#allocation9], 0
    %15 = vsyncpa [#allocation4], 0
    // Predicated region
    $region2: #{tpu_custom_call.1} parent=1 // pred_check
      _
    $region3: #{tpu_custom_call.1} parent=1 // pred_check_branch
      %17 = sbr.rel (0) target = $region5
    $region4: #{tpu_custom_call.1} parent=1 // pred_region
      %s19 = ssub.s32 128, 128
      %20 = vsyncadd [#allocation3], %s19
      %s22 = sshll.u32 [#allocation2], 4
      %s23 = int_to_ptr.vmem [resolvable:$true] %s22
      %25 = dma.hbm_to_vmem [thread:$0]  %s0, 128, %s23, [#allocation3]
    $region5: #{tpu_custom_call.1} parent=1 // pred_fallthru
      _
    // Predicated region
    $region6: #{tpu_custom_call.1} parent=1 // pred_check
      _
    $region7: #{tpu_custom_call.1} parent=1 // pred_check_branch
      %27 = sbr.rel (0) target = $region9
    $region8: #{tpu_custom_call.1} parent=1 // pred_region
      %s29 = ssub.s32 64, 64
      %30 = vsyncadd [#allocation6], %s29
      %s32 = sshll.u32 [#allocation5], 4
      %s33 = int_to_ptr.vmem [resolvable:$true] %s32
      %35 = dma.hbm_to_vmem [thread:$0]  %s1, 64, %s33, [#allocation6]
    $region9: #{tpu_custom_call.1} parent=1 // pred_fallthru
      _
    // Predicated region
    $region10: #{tpu_custom_call.1} parent=1 // pred_check
      _
    $region11: #{tpu_custom_call.1} parent=1 // pred_check_branch
      %37 = sbr.rel (0) target = $region13
    $region12: #{tpu_custom_call.1} parent=1 // pred_region
      _
    $region13: #{tpu_custom_call.1} parent=1 // pred_fallthru
      _
    // Predicated region
    $region14: #{tpu_custom_call.1} parent=1 // pred_check
      _
    $region15: #{tpu_custom_call.1} parent=1 // pred_check_branch
      %39 = sbr.rel (0) target = $region17
    $region16: #{tpu_custom_call.1} parent=1 // pred_region
      %s41 = ssub.s32 1024, 1024
      %42 = vsyncadd [#allocation6], %s41
      %s43 = sshll.u32 [#allocation7], 4
      %s44 = int_to_ptr.vmem [resolvable:$true] %s43
      %49 = dma.hbm_to_vmem [thread:$0]  %s3, 1024, %s44, [#allocation6], 64, 64, 4
    $region17: #{tpu_custom_call.1} parent=1 // pred_fallthru
      _
    // Predicated region
    $region18: #{tpu_custom_call.1} parent=1 // pred_check
      _
    $region19: #{tpu_custom_call.1} parent=1 // pred_check_branch
      %51 = sbr.rel (0) target = $region21
    $region20: #{tpu_custom_call.1} parent=1 // pred_region
      _
    $region21: #{tpu_custom_call.1} parent=1 // pred_fallthru
      _
    // Predicated region
    $region22: #{tpu_custom_call.1} parent=1 // pred_check
      _
    $region23: #{tpu_custom_call.1} parent=1 // pred_check_branch
      %53 = sbr.rel (0) target = $region25
    $region24: #{tpu_custom_call.1} parent=1 // pred_region
      %s55 = ssub.s32 1024, 1024
      %56 = vsyncadd [#allocation9], %s55
      %s57 = sshll.u32 [#allocation8], 4
      %s58 = int_to_ptr.vmem [resolvable:$true] %s57
      %63 = dma.hbm_to_vmem [thread:$0]  %s5, 1024, %s58, [#allocation9], 64, 64, 4
    $region25: #{tpu_custom_call.1} parent=1 // pred_fallthru
      _
    // Predicated region
    $region26: #{tpu_custom_call.1} parent=1 // pred_check
      _
    $region27: #{tpu_custom_call.1} parent=1 // pred_check_branch
      %65 = sbr.rel (0) target = $region29
    $region28: #{tpu_custom_call.1} parent=1 // pred_region
      _
    $region29: #{tpu_custom_call.1} parent=1 // pred_fallthru
      _
    // Predicated region
    $region30: #{tpu_custom_call.1} parent=1 // pred_check
      _
    $region31: #{tpu_custom_call.1} parent=1 // pred_check_branch
      %67 = sbr.rel (0) target = $region33
    $region32: #{tpu_custom_call.1} parent=1 // pred_region
      %68 = dma.done [#allocation3], 128
    $region33: #{tpu_custom_call.1} parent=1 // pred_fallthru
      _
    // Predicated region
    $region34: #{tpu_custom_call.1} parent=1 // pred_check
      _
    $region35: #{tpu_custom_call.1} parent=1 // pred_check_branch
      %70 = sbr.rel (0) target = $region37
    $region36: #{tpu_custom_call.1} parent=1 // pred_region
      %71 = dma.done [#allocation6], 64
    $region37: #{tpu_custom_call.1} parent=1 // pred_fallthru
      _
    // Predicated region
    $region38: #{tpu_custom_call.1} parent=1 // pred_check
      _
    $region39: #{tpu_custom_call.1} parent=1 // pred_check_branch
      %73 = sbr.rel (0) target = $region41
    $region40: #{tpu_custom_call.1} parent=1 // pred_region
      %74 = dma.done [#allocation6], 1024
    $region41: #{tpu_custom_call.1} parent=1 // pred_fallthru
      _
    // Predicated region
    $region42: #{tpu_custom_call.1} parent=1 // pred_check
      _
    $region43: #{tpu_custom_call.1} parent=1 // pred_check_branch
      %76 = sbr.rel (0) target = $region45
    $region44: #{tpu_custom_call.1} parent=1 // pred_region
      %77 = dma.done [#allocation9], 1024
    $region45: #{tpu_custom_call.1} parent=1 // pred_fallthru
      _
    %v79 = vld [vmem:[#allocation2] sm:$0xff]
    %v80 = vpack.c.bf16 %v79, %v79
    %v81 = vld [vmem:[#allocation5] sm:$0xf]
    %v82 = vld [vmem:[%s2] sm:$0x1]
    %v84 = vlaneseq
    %v85 = vshrl.u32 %v84, 7
    %v86 = vsub.s32 0, %v85
    %v87 = vrot.slane %v82, %v86
    %vm89 = vcmask 64512
    %v91 = vsel %vm89, %v80, 0
    %vm93 = vcmask 1043456
    %v95 = vsel %vm93, %v81, 0
    %97 = vmatprep.subr.bf16.mxu0 0
    %98 = vmatpush1.bf16.msra.mxu0 %v95
    %99 = vmatprep.subr.bf16.mxu0 0
    %100 = vmatpush1.bf16.msra.mxu0 0
    %101 = vmatprep.subr.bf16.mxu0 0
    %102 = vmatpush1.bf16.msra.mxu0 0
    %103 = vmatprep.subr.bf16.mxu0 0
    %104 = vmatpush1.bf16.msra.mxu0 0
    %105 = vmatprep.subr.bf16.mxu0 0
    %106 = vmatpush1.bf16.msra.mxu0 0
    %107 = vmatprep.subr.bf16.mxu0 0
    %108 = vmatpush1.bf16.msra.mxu0 0
    %109 = vmatprep.subr.bf16.mxu0 0
    %110 = vmatpush1.bf16.msra.mxu0 0
    %111 = vmatprep.subr.bf16.mxu0 0
    %112 = vmatpush1.bf16.msra.mxu0 0
    %113 = vmatprep.subr.bf16.mxu0 0
    %114 = vmatpush1.bf16.msra.mxu0 0
    %115 = vmatprep.subr.bf16.mxu0 0
    %116 = vmatpush1.bf16.msra.mxu0 0
    %117 = vmatprep.subr.bf16.mxu0 0
    %118 = vmatpush1.bf16.msra.mxu0 0
    %119 = vmatprep.subr.bf16.mxu0 0
    %120 = vmatpush1.bf16.msra.mxu0 0
    %121 = vmatprep.subr.bf16.mxu0 0
    %122 = vmatpush1.bf16.msra.mxu0 0
    %123 = vmatprep.subr.bf16.mxu0 0
    %124 = vmatpush1.bf16.msra.mxu0 0
    %125 = vmatprep.subr.bf16.mxu0 0
    %126 = vmatpush1.bf16.msra.mxu0 0
    %127 = vmatprep.subr.bf16.mxu0 0
    %128 = vmatpush1.bf16.msra.mxu0 0
    %129 = vmatprep.mubr.bf16.mxu0 0
    %130 = vmatmul.mubr.bf16.gmra.mrb[0].mxu0 %v91
    %v131 = vpop.f32.mrb[0].mxu0
    %v132 = vadd.f32 %v87, %v131
    %v133 = vpop.f32.mrb[0].mxu0
    %v134 = vpop.f32.mrb[0].mxu0
    %v135 = vpop.f32.mrb[0].mxu0
    %136 = vdwg.mxu0
    %v137 = vmax.f32 %v132, 0.0
    %v138 = vpack.c.bf16 %v137, %v137
    %v139 = vld [vmem:[#allocation7] sm:$0xf]
    %v140 = vld [vmem:[#allocation7 + $0x4] sm:$0xf]
    %v141 = vld [vmem:[#allocation7 + $0x8] sm:$0xf]
    %v142 = vld [vmem:[#allocation7 + $0xc] sm:$0xf]
    %v143 = vld [vmem:[#allocation7 + $0x10] sm:$0xf]
    %v144 = vld [vmem:[#allocation7 + $0x14] sm:$0xf]
    %v145 = vld [vmem:[#allocation7 + $0x18] sm:$0xf]
    %v146 = vld [vmem:[#allocation7 + $0x1c] sm:$0xf]
    %v147 = vld [vmem:[#allocation7 + $0x20] sm:$0xf]
    %v148 = vld [vmem:[#allocation7 + $0x24] sm:$0xf]
    %v149 = vld [vmem:[#allocation7 + $0x28] sm:$0xf]
    %v150 = vld [vmem:[#allocation7 + $0x2c] sm:$0xf]
    %v151 = vld [vmem:[#allocation7 + $0x30] sm:$0xf]
    %v152 = vld [vmem:[#allocation7 + $0x34] sm:$0xf]
    %v153 = vld [vmem:[#allocation7 + $0x38] sm:$0xf]
    %v154 = vld [vmem:[#allocation7 + $0x3c] sm:$0xf]
    %v155 = vld [vmem:[%s4] sm:$0x1]
    %v157 = vlaneseq
    %v158 = vshrl.u32 %v157, 7
    %v159 = vsub.s32 0, %v158
    %v160 = vrot.slane %v155, %v159
    %v178 = vunpack.c.l.b16 %v139
    %v179 = vunpack.c.l.b16 %v140
    %v180 = vunpack.c.l.b16 %v141
    %v181 = vunpack.c.l.b16 %v142
    %v182 = vunpack.c.l.b16 %v143
    %v183 = vunpack.c.l.b16 %v144
    %v184 = vunpack.c.l.b16 %v145
    %v185 = vunpack.c.l.b16 %v146
    %v186 = vunpack.c.l.b16 %v147
    %v187 = vunpack.c.l.b16 %v148
    %v188 = vunpack.c.l.b16 %v149
    %v189 = vunpack.c.l.b16 %v150
    %v190 = vunpack.c.l.b16 %v151
    %v191 = vunpack.c.l.b16 %v152
    %v192 = vunpack.c.l.b16 %v153
    %v193 = vunpack.c.l.b16 %v154
    %v194 = vpack.c.b16 %v179, %v178
    %v195 = vpack.c.b16 %v181, %v180
    %v196 = vpack.c.b16 %v183, %v182
    %v197 = vpack.c.b16 %v185, %v184
    %v198 = vpack.c.b16 %v187, %v186
    %v199 = vpack.c.b16 %v189, %v188
    %v200 = vpack.c.b16 %v191, %v190
    %v201 = vpack.c.b16 %v193, %v192
    %210 = vmatprep.subr.bf16.mxu0 0
    %211 = vmatpush1.bf16.msra.mxu0 %v194
    %212 = vmatprep.subr.bf16.mxu0 0
    %213 = vmatpush1.bf16.msra.mxu0 %v195
    %214 = vmatprep.subr.bf16.mxu0 0
    %215 = vmatpush1.bf16.msra.mxu0 %v196
    %216 = vmatprep.subr.bf16.mxu0 0
    %217 = vmatpush1.bf16.msra.mxu0 %v197
    %218 = vmatprep.subr.bf16.mxu0 0
    %219 = vmatpush1.bf16.msra.mxu0 %v198
    %220 = vmatprep.subr.bf16.mxu0 0
    %221 = vmatpush1.bf16.msra.mxu0 %v199
    %222 = vmatprep.subr.bf16.mxu0 0
    %223 = vmatpush1.bf16.msra.mxu0 %v200
    %224 = vmatprep.subr.bf16.mxu0 0
    %225 = vmatpush1.bf16.msra.mxu0 %v201
    %226 = vmatprep.subr.bf16.mxu0 0
    %227 = vmatpush1.bf16.msra.mxu0 0
    %228 = vmatprep.subr.bf16.mxu0 0
    %229 = vmatpush1.bf16.msra.mxu0 0
    %230 = vmatprep.subr.bf16.mxu0 0
    %231 = vmatpush1.bf16.msra.mxu0 0
    %232 = vmatprep.subr.bf16.mxu0 0
    %233 = vmatpush1.bf16.msra.mxu0 0
    %234 = vmatprep.subr.bf16.mxu0 0
    %235 = vmatpush1.bf16.msra.mxu0 0
    %236 = vmatprep.subr.bf16.mxu0 0
    %237 = vmatpush1.bf16.msra.mxu0 0
    %238 = vmatprep.subr.bf16.mxu0 0
    %239 = vmatpush1.bf16.msra.mxu0 0
    %240 = vmatprep.subr.bf16.mxu0 0
    %241 = vmatpush1.bf16.msra.mxu0 0
    %242 = vmatprep.mubr.bf16.mxu0 0
    %243 = vmatmul.mubr.bf16.gmra.mrb[0].mxu0 %v138
    %v244 = vpop.f32.mrb[0].mxu0
    %v245 = vadd.f32 %v160, %v244
    %v246 = vpop.f32.mrb[0].mxu0
    %v247 = vpop.f32.mrb[0].mxu0
    %v248 = vpop.f32.mrb[0].mxu0
    %249 = vdwg.mxu0
    %v250 = vmax.f32 %v245, 0.0
    %v251 = vpack.c.bf16 %v250, %v250
    %v252 = vld [vmem:[#allocation8] sm:$0xf]
    %v253 = vld [vmem:[#allocation8 + $0x4] sm:$0xf]
    %v254 = vld [vmem:[#allocation8 + $0x8] sm:$0xf]
    %v255 = vld [vmem:[#allocation8 + $0xc] sm:$0xf]
    %v256 = vld [vmem:[#allocation8 + $0x10] sm:$0xf]
    %v257 = vld [vmem:[#allocation8 + $0x14] sm:$0xf]
    %v258 = vld [vmem:[#allocation8 + $0x18] sm:$0xf]
    %v259 = vld [vmem:[#allocation8 + $0x1c] sm:$0xf]
    %v260 = vld [vmem:[#allocation8 + $0x20] sm:$0xf]
    %v261 = vld [vmem:[#allocation8 + $0x24] sm:$0xf]
    %v262 = vld [vmem:[#allocation8 + $0x28] sm:$0xf]
    %v263 = vld [vmem:[#allocation8 + $0x2c] sm:$0xf]
    %v264 = vld [vmem:[#allocation8 + $0x30] sm:$0xf]
    %v265 = vld [vmem:[#allocation8 + $0x34] sm:$0xf]
    %v266 = vld [vmem:[#allocation8 + $0x38] sm:$0xf]
    %v267 = vld [vmem:[#allocation8 + $0x3c] sm:$0xf]
    %v268 = vld [vmem:[%s6] sm:$0x1]
    %v270 = vlaneseq
    %v271 = vshrl.u32 %v270, 7
    %v272 = vsub.s32 0, %v271
    %v273 = vrot.slane %v268, %v272
    %v291 = vunpack.c.l.b16 %v252
    %v292 = vunpack.c.l.b16 %v253
    %v293 = vunpack.c.l.b16 %v254
    %v294 = vunpack.c.l.b16 %v255
    %v295 = vunpack.c.l.b16 %v256
    %v296 = vunpack.c.l.b16 %v257
    %v297 = vunpack.c.l.b16 %v258
    %v298 = vunpack.c.l.b16 %v259
    %v299 = vunpack.c.l.b16 %v260
    %v300 = vunpack.c.l.b16 %v261
    %v301 = vunpack.c.l.b16 %v262
    %v302 = vunpack.c.l.b16 %v263
    %v303 = vunpack.c.l.b16 %v264
    %v304 = vunpack.c.l.b16 %v265
    %v305 = vunpack.c.l.b16 %v266
    %v306 = vunpack.c.l.b16 %v267
    %v307 = vpack.c.b16 %v292, %v291
    %v308 = vpack.c.b16 %v294, %v293
    %v309 = vpack.c.b16 %v296, %v295
    %v310 = vpack.c.b16 %v298, %v297
    %v311 = vpack.c.b16 %v300, %v299
    %v312 = vpack.c.b16 %v302, %v301
    %v313 = vpack.c.b16 %v304, %v303
    %v314 = vpack.c.b16 %v306, %v305
    %323 = vmatprep.subr.bf16.mxu0 0
    %324 = vmatpush1.bf16.msra.mxu0 %v307
    %325 = vmatprep.subr.bf16.mxu0 0
    %326 = vmatpush1.bf16.msra.mxu0 %v308
    %327 = vmatprep.subr.bf16.mxu0 0
    %328 = vmatpush1.bf16.msra.mxu0 %v309
    %329 = vmatprep.subr.bf16.mxu0 0
    %330 = vmatpush1.bf16.msra.mxu0 %v310
    %331 = vmatprep.subr.bf16.mxu0 0
    %332 = vmatpush1.bf16.msra.mxu0 %v311
    %333 = vmatprep.subr.bf16.mxu0 0
    %334 = vmatpush1.bf16.msra.mxu0 %v312
    %335 = vmatprep.subr.bf16.mxu0 0
    %336 = vmatpush1.bf16.msra.mxu0 %v313
    %337 = vmatprep.subr.bf16.mxu0 0
    %338 = vmatpush1.bf16.msra.mxu0 %v314
    %339 = vmatprep.subr.bf16.mxu0 0
    %340 = vmatpush1.bf16.msra.mxu0 0
    %341 = vmatprep.subr.bf16.mxu0 0
    %342 = vmatpush1.bf16.msra.mxu0 0
    %343 = vmatprep.subr.bf16.mxu0 0
    %344 = vmatpush1.bf16.msra.mxu0 0
    %345 = vmatprep.subr.bf16.mxu0 0
    %346 = vmatpush1.bf16.msra.mxu0 0
    %347 = vmatprep.subr.bf16.mxu0 0
    %348 = vmatpush1.bf16.msra.mxu0 0
    %349 = vmatprep.subr.bf16.mxu0 0
    %350 = vmatpush1.bf16.msra.mxu0 0
    %351 = vmatprep.subr.bf16.mxu0 0
    %352 = vmatpush1.bf16.msra.mxu0 0
    %353 = vmatprep.subr.bf16.mxu0 0
    %354 = vmatpush1.bf16.msra.mxu0 0
    %355 = vmatprep.mubr.bf16.mxu0 0
    %356 = vmatmul.mubr.bf16.gmra.mrb[0].mxu0 %v251
    %v357 = vpop.f32.mrb[0].mxu0
    %v358 = vadd.f32 %v273, %v357
    %v359 = vpop.f32.mrb[0].mxu0
    %v360 = vpop.f32.mrb[0].mxu0
    %v361 = vpop.f32.mrb[0].mxu0
    %362 = vdwg.mxu0
    %363 = vst [vmem:[#allocation10] sm:$0xff] %v358
    // Predicated region
    $region46: #{tpu_custom_call.1} parent=1 // pred_check
      _
    $region47: #{tpu_custom_call.1} parent=1 // pred_check_branch
      %365 = sbr.rel (0) target = $region49
    $region48: #{tpu_custom_call.1} parent=1 // pred_region
      %s367 = ssub.s32 128, 128
      %368 = vsyncadd [#allocation4], %s367
      %s370 = sshll.u32 [#allocation10], 4
      %s371 = int_to_ptr.vmem [resolvable:$true] %s370
      %373 = dma.vmem_to_hbm [thread:$0]  %s371, 128, %s7, [#allocation4]
    $region49: #{tpu_custom_call.1} parent=1 // pred_fallthru
      _
    // Predicated region
    $region50: #{tpu_custom_call.1} parent=1 // pred_check
      _
    $region51: #{tpu_custom_call.1} parent=1 // pred_check_branch
      %375 = sbr.rel (0) target = $region53
    $region52: #{tpu_custom_call.1} parent=1 // pred_region
      %376 = dma.done [#allocation4], 128
    $region53: #{tpu_custom_call.1} parent=1 // pred_fallthru
      _
    %377 = vsyncpa [#allocation3], 1
    %378 = vsyncpa [#allocation6], 1
    %379 = vsyncpa [#allocation9], 1
    %380 = vsyncpa [#allocation4], 1

</llo_original>
